<compile_context>
chip_gen: v5e
topology: v5e:2x2
jax: 0.10.0
libtpu: 0.0.40
codegen_flags: <defaults>
</compile_context>

<pallas_src>
import functools

import jax
import jax.numpy as jnp
from jax.experimental import pallas as pl
from jax.experimental.pallas import tpu as pltpu


def _round_up(x, m):
    return ((x + m - 1) // m) * m


def _fm_embedding_kernel(gidx_ref, rhs_hi_ref, rhs_mid_ref, rhs_lo_ref, o_ref):
    # gidx_ref:  (TB, F)       int32   global one-hot index = f*V + x[b,f] + offsets[f]
    # rhs_*_ref: (K_pad, F*E)  bf16    hi/mid/lo split of the block-diagonal table
    # o_ref:     (TB, F*E)     f32     lane-dense output block
    tb, num_fields = gidx_ref.shape
    k_pad = rhs_hi_ref.shape[0]

    gidx = gidx_ref[...]                                           # (TB, F) int32
    kiota = jax.lax.broadcasted_iota(jnp.int32, (tb, k_pad), 1)    # (TB, K_pad)

    # One-hot built directly in 2-D: one lane-broadcast compare per field.
    hit = kiota == gidx[:, 0:1]
    for f in range(1, num_fields):                                 # F is tiny & static
        hit = hit | (kiota == gidx[:, f : f + 1])
    onehot = jnp.where(hit, 1.0, 0.0).astype(jnp.bfloat16)         # exact 0/1 in bf16

    # 3 bf16 MXU passes with f32 accumulation: exact gather of the f32 table
    # (one-hot LHS -> each output element is hi + mid + lo summed in f32).
    acc = jnp.dot(onehot, rhs_hi_ref[...], preferred_element_type=jnp.float32)
    acc += jnp.dot(onehot, rhs_mid_ref[...], preferred_element_type=jnp.float32)
    acc += jnp.dot(onehot, rhs_lo_ref[...], preferred_element_type=jnp.float32)

    o_ref[...] = acc


@functools.partial(jax.jit, static_argnames=("block_rows",))
def fm_embedding_forward(input_x, offsets, table, *, block_rows=2048):
    """input_x: (B, F) int; offsets: (F,) int; table: (V, E) f32 -> (B, F, E) f32."""
    B, F = input_x.shape
    V, E = table.shape
    N = F * E                       # lane-dense output width (128 for F=4, E=32)
    K_pad = _round_up(F * V, 128)   # one-hot / RHS contraction dim, lane padded

    # --- batch tiling: big tiles, but >= 2 grid steps when possible (v7x megacore)
    b8 = _round_up(B, 8)
    tb = min(block_rows, b8)
    if b8 // tb < 2 and b8 >= 16:
        tb = _round_up((b8 + 1) // 2, 8)
    b_pad = _round_up(B, tb)

    # --- global one-hot indices: f*V + x + offsets  (offsets add folded into wrapper)
    x = input_x.astype(jnp.int32)
    off = jnp.asarray(offsets, dtype=jnp.int32).reshape(1, F)
    fbase = (jnp.arange(F, dtype=jnp.int32) * V).reshape(1, F)
    gidx = x + off + fbase                                         # (B, F)
    if b_pad != B:
        # Padded rows use global index 0 -> always a valid RHS row; sliced off below.
        gidx = jnp.pad(gidx, ((0, b_pad - B), (0, 0)))

    # --- block-diagonal RHS (constant): block (f, f) = table
    table_f32 = table.astype(jnp.float32)
    rhs = jnp.zeros((K_pad, N), jnp.float32)
    for f in range(F):
        rhs = rhs.at[f * V : (f + 1) * V, f * E : (f + 1) * E].set(table_f32)

    # hi/mid/lo bf16 split (exact f32 reconstruction under a one-hot matmul).
    rhs_hi = rhs.astype(jnp.bfloat16)
    r1 = rhs - rhs_hi.astype(jnp.float32)
    rhs_mid = r1.astype(jnp.bfloat16)
    r2 = r1 - rhs_mid.astype(jnp.float32)
    rhs_lo = r2.astype(jnp.bfloat16)

    rhs_spec = pl.BlockSpec((K_pad, N), lambda i: (0, 0))

    out = pl.pallas_call(
        _fm_embedding_kernel,
        out_shape=jax.ShapeDtypeStruct((b_pad, N), jnp.float32),
        grid_spec=pltpu.PrefetchScalarGridSpec(
            num_scalar_prefetch=0,
            grid=(b_pad // tb,),
            in_specs=[
                pl.BlockSpec((tb, F), lambda i: (i, 0)),
                rhs_spec,
                rhs_spec,
                rhs_spec,
            ],
            out_specs=pl.BlockSpec((tb, N), lambda i: (i, 0)),
        ),
        compiler_params=pltpu.CompilerParams(
            dimension_semantics=("parallel",),
            # Few MiB of blocks + temporaries double-buffered; 32 MiB is safe
            # headroom on v5e/v6e (128 MiB physical) and v7x (64 MiB physical).
            vmem_limit_bytes=32 * 1024 * 1024,
        ),
    )(gidx, rhs_hi, rhs_mid, rhs_lo)

    return out[:B].reshape(B, F, E)


def fm_embedding_reference(input_x, offsets, table):
    idx = input_x.astype(jnp.int32) + jnp.asarray(offsets, jnp.int32)[None, :]
    return jnp.take(table, idx, axis=0)


if __name__ == "__main__":
    key = jax.random.PRNGKey(0)

    # Small shapes consistent with the module: 4 token fields, embed_dim=32.
    field_dims = [3, 5, 7, 9]
    F = len(field_dims)
    vocab = sum(field_dims)                       # 24
    offsets = [0] + list(jnp.cumsum(jnp.asarray(field_dims))[:-1].tolist())
    embed_dim = 32
    B = 10                                        # exercises padding + 2-tile grid

    k_tok, k_tab = jax.random.split(key, 2)
    tok_keys = jax.random.split(k_tok, F)
    tokens = jnp.stack(
        [jax.random.randint(k, (B,), 0, fd, dtype=jnp.int32)
         for k, fd in zip(tok_keys, field_dims)],
        axis=1,
    )                                             # (B, F)
    # nn.Embedding weight ~ N(0, 1) by default, shape (sum(field_dims), embed_dim).
    table = jax.random.normal(k_tab, (vocab, embed_dim), dtype=jnp.float32)

    out = jax.block_until_ready(
        fm_embedding_forward(tokens, jnp.asarray(offsets, jnp.int32), table)
    )
    ref = jax.block_until_ready(
        fm_embedding_reference(tokens, jnp.asarray(offsets, jnp.int32), table)
    )

    assert out.shape == (B, F, embed_dim), out.shape
    assert jnp.allclose(out, ref, atol=1e-5, rtol=1e-5), (out, ref)

    print("KERNEL_OK")
</pallas_src>

<mosaic_0001>
module attributes {stable_mosaic.version = 11 : i64} {
  func.func @_fm_embedding_kernel(%arg0: i32, %arg1: memref<8x4xi32, #tpu.memory_space<vmem>>, %arg2: memref<128x128xbf16, #tpu.memory_space<vmem>>, %arg3: memref<128x128xbf16, #tpu.memory_space<vmem>>, %arg4: memref<128x128xbf16, #tpu.memory_space<vmem>>, %arg5: memref<8x128xf32, #tpu.memory_space<vmem>>) attributes {dimension_semantics = [#tpu.dimension_semantics<parallel>], iteration_bounds = array<i64: 2>, scalar_prefetch = 0 : i64, scratch_operands = 0 : i64, tpu.core_type = #tpu.core_type<tc>, window_params = [{transform_indices = @transform_0, window_bounds = array<i64: 8, 4>}, {pipeline_mode = #tpu.pipeline_mode<synchronous>, transform_indices = @transform_1, window_bounds = array<i64: 128, 128>}, {pipeline_mode = #tpu.pipeline_mode<synchronous>, transform_indices = @transform_2, window_bounds = array<i64: 128, 128>}, {pipeline_mode = #tpu.pipeline_mode<synchronous>, transform_indices = @transform_3, window_bounds = array<i64: 128, 128>}, {transform_indices = @transform_4, window_bounds = array<i64: 8, 128>}]} {
    %c0 = arith.constant 0 : index
    %c0_0 = arith.constant 0 : index
    %0 = vector.load %arg1[%c0, %c0_0] : memref<8x4xi32, #tpu.memory_space<vmem>>, vector<8x4xi32>
    %1 = tpu.iota {dimensions = array<i32: 1>} : vector<8x128xi32>
    %2 = vector.extract_strided_slice %0 {offsets = [0, 0], sizes = [8, 1], strides = [1, 1]} : vector<8x4xi32> to vector<8x1xi32>
    %3 = vector.broadcast %2 : vector<8x1xi32> to vector<8x128xi32>
    %4 = arith.cmpi eq, %1, %3 : vector<8x128xi32>
    %5 = vector.extract_strided_slice %0 {offsets = [0, 1], sizes = [8, 1], strides = [1, 1]} : vector<8x4xi32> to vector<8x1xi32>
    %6 = vector.broadcast %5 : vector<8x1xi32> to vector<8x128xi32>
    %7 = arith.cmpi eq, %1, %6 : vector<8x128xi32>
    %8 = arith.ori %4, %7 : vector<8x128xi1>
    %9 = vector.extract_strided_slice %0 {offsets = [0, 2], sizes = [8, 1], strides = [1, 1]} : vector<8x4xi32> to vector<8x1xi32>
    %10 = vector.broadcast %9 : vector<8x1xi32> to vector<8x128xi32>
    %11 = arith.cmpi eq, %1, %10 : vector<8x128xi32>
    %12 = arith.ori %8, %11 : vector<8x128xi1>
    %13 = vector.extract_strided_slice %0 {offsets = [0, 3], sizes = [8, 1], strides = [1, 1]} : vector<8x4xi32> to vector<8x1xi32>
    %14 = vector.broadcast %13 : vector<8x1xi32> to vector<8x128xi32>
    %15 = arith.cmpi eq, %1, %14 : vector<8x128xi32>
    %16 = arith.ori %12, %15 : vector<8x128xi1>
    %cst = arith.constant 1.000000e+00 : f32
    %cst_1 = arith.constant 0.000000e+00 : f32
    %17 = vector.broadcast %cst : f32 to vector<8x128xf32>
    %18 = vector.broadcast %cst_1 : f32 to vector<8x128xf32>
    %19 = arith.select %16, %17, %18 : vector<8x128xi1>, vector<8x128xf32>
    %20 = arith.truncf %19 : vector<8x128xf32> to vector<8x128xbf16>
    %c0_2 = arith.constant 0 : index
    %c0_3 = arith.constant 0 : index
    %21 = vector.load %arg2[%c0_2, %c0_3] : memref<128x128xbf16, #tpu.memory_space<vmem>>, vector<128x128xbf16>
    %cst_4 = arith.constant dense<0.000000e+00> : vector<8x128xf32>
    %22 = tpu.matmul %20, %21, %cst_4 {dimension_numbers = #tpu.dot_dimension_numbers<[1], [0], [0], [1], [0, 0, 1, 1], [], []>} : vector<8x128xbf16>, vector<128x128xbf16>, vector<8x128xf32> -> vector<8x128xf32>
    %c0_5 = arith.constant 0 : index
    %c0_6 = arith.constant 0 : index
    %23 = vector.load %arg3[%c0_5, %c0_6] : memref<128x128xbf16, #tpu.memory_space<vmem>>, vector<128x128xbf16>
    %cst_7 = arith.constant dense<0.000000e+00> : vector<8x128xf32>
    %24 = tpu.matmul %20, %23, %cst_7 {dimension_numbers = #tpu.dot_dimension_numbers<[1], [0], [0], [1], [0, 0, 1, 1], [], []>} : vector<8x128xbf16>, vector<128x128xbf16>, vector<8x128xf32> -> vector<8x128xf32>
    %25 = arith.addf %22, %24 : vector<8x128xf32>
    %c0_8 = arith.constant 0 : index
    %c0_9 = arith.constant 0 : index
    %26 = vector.load %arg4[%c0_8, %c0_9] : memref<128x128xbf16, #tpu.memory_space<vmem>>, vector<128x128xbf16>
    %cst_10 = arith.constant dense<0.000000e+00> : vector<8x128xf32>
    %27 = tpu.matmul %20, %26, %cst_10 {dimension_numbers = #tpu.dot_dimension_numbers<[1], [0], [0], [1], [0, 0, 1, 1], [], []>} : vector<8x128xbf16>, vector<128x128xbf16>, vector<8x128xf32> -> vector<8x128xf32>
    %28 = arith.addf %25, %27 : vector<8x128xf32>
    %c0_11 = arith.constant 0 : index
    %c0_12 = arith.constant 0 : index
    %29 = vector.load %arg5[%c0_11, %c0_12] : memref<8x128xf32, #tpu.memory_space<vmem>>, vector<8x128xf32>
    tpu.vector_store %arg5[%c0_11, %c0_12], %28 {strides = array<i32>} : memref<8x128xf32, #tpu.memory_space<vmem>>, vector<8x128xf32>,
    return
  }
  func.func @transform_0(%arg0: i32) -> (i32, i32) {
    %c0_i32 = arith.constant 0 : i32
    %c0_i32_0 = arith.constant 0 : i32
    return %arg0, %c0_i32 : i32, i32
  }
  func.func @transform_1(%arg0: i32) -> (i32, i32) {
    %c0_i32 = arith.constant 0 : i32
    %c0_i32_0 = arith.constant 0 : i32
    %c0_i32_1 = arith.constant 0 : i32
    return %c0_i32, %c0_i32_0 : i32, i32
  }
  func.func @transform_2(%arg0: i32) -> (i32, i32) {
    %c0_i32 = arith.constant 0 : i32
    %c0_i32_0 = arith.constant 0 : i32
    %c0_i32_1 = arith.constant 0 : i32
    return %c0_i32, %c0_i32_0 : i32, i32
  }
  func.func @transform_3(%arg0: i32) -> (i32, i32) {
    %c0_i32 = arith.constant 0 : i32
    %c0_i32_0 = arith.constant 0 : i32
    %c0_i32_1 = arith.constant 0 : i32
    return %c0_i32, %c0_i32_0 : i32, i32
  }
  func.func @transform_4(%arg0: i32) -> (i32, i32) {
    %c0_i32 = arith.constant 0 : i32
    %c0_i32_0 = arith.constant 0 : i32
    return %arg0, %c0_i32 : i32, i32
  }
}

</mosaic_0001>

<llo_original>
// kernel: fm_embedding_forward.1
$region0: #{fm_embedding_forward.1}
  #allocation0 [shape = 'u32[]', space=smem, size = 0x4, offset = 0x4, fixed_abs, tag = 'smem constant byte address 0x4 - core index']
  #allocation1 [shape = 'u32[72,128]{1,0:T(1,128)}', space=vmem, size = 0x9000, scoped, tag = 'internal scratch']
  %s0 = inlined_call_operand.vmem [shape: s32[16,4], index: 0, kind: input, shape index: {}]
  %s1 = inlined_call_operand.vmem [shape: bf16[128,128], index: 1, kind: input, shape index: {}]
  %s2 = inlined_call_operand.vmem [shape: bf16[128,128], index: 2, kind: input, shape index: {}]
  %s3 = inlined_call_operand.vmem [shape: bf16[128,128], index: 3, kind: input, shape index: {}]
  %s4 = inlined_call_operand.vmem [shape: f32[16,128], index: 4, kind: output, shape index: {}]
  %s5 = sld [smem:[#allocation0]]
  $region49: #{fm_embedding_forward.1} parent=0
    _
  %s7 = ssub.s32 1, %s5
  %s8 = scalar_select 0, %s7, %s5
  loop: start=0, step=1, limit=4
  $region2: #{fm_embedding_forward.1} parent=0 // loop_pre_header
    _
  $region3: #{fm_embedding_forward.1} parent=0 // loop_header
    %s10 = sphi 0, %s14
    %p11 = scmp.ge.s32.totalorder %s10, 4
    %s20 = sphi 0, %s22
    %s23 = sphi 0, %s20
    %s24 = sphi 0, %s23
    %s40 = sphi 0, %s24
    %s44 = sphi 0, %s44
    %s46 = sphi 0, %s44
    %s47 = sphi 0, %s46
    %s61 = sphi 0, %s47
    %s65 = sphi 0, %s65
    %s67 = sphi 0, %s65
    %s68 = sphi 0, %s67
    %s82 = sphi 0, %s68
    %s86 = sphi 0, %s86
    %s88 = sphi 0, %s86
    %s89 = sphi 0, %s88
    %s103 = sphi 0, %s89
    %s109 = sphi 0, %s111
    %s112 = sphi 0, %s109
    %s113 = sphi 0, %s112
    %s129 = sphi 0, %s113
  $region4: #{fm_embedding_forward.1} parent=0 // loop_header_branch
    %13 = sbr.rel (%p11) target = $region8
  $region5: #{fm_embedding_forward.1} parent=0 // loop_body
    %s15 = ssub.s32 %s10, 1
    %s16 = ssub.s32 %s10, 2
    %s17 = sadd.s32 %s10, 1
    %s18 = ssub.s32 %s10, %s17
    %p19 = scmp.eq.s32.totalorder %s18, 0
    %s21 = sadd.s32 %s20, 1
    %s22 = scalar_select %p19, %s20, %s21
    %p25 = pneg %p19
    %p26 = scmp.eq.s32.totalorder %s10, 1
    %p27 = por %p25, %p26
    %p28 = scmp.ne.s32.totalorder %s20, %s23
    %p29 = scmp.eq.s32.totalorder %s10, 0
    %p30 = por %p28, %p29
    %p31 = scmp.ne.s32.totalorder %s20, %s23
    %p32 = scmp.eq.s32.totalorder %s15, 1
    %p33 = por %p31, %p32
    %p34 = scmp.ne.s32.totalorder %s23, %s24
    %p35 = scmp.eq.s32.totalorder %s15, 0
    %p36 = por %p34, %p35
    %p37 = scmp.ne.s32.totalorder %s23, %s24
    %p38 = scmp.eq.s32.totalorder %s16, 1
    %p39 = por %p37, %p38
    %p41 = scmp.ne.s32.totalorder %s24, %s40
    %p42 = scmp.eq.s32.totalorder %s16, 0
    %p43 = por %p41, %p42
    %s45 = sadd.s32 %s44, 1
    %p48 = scmp.eq.s32.totalorder %s10, 1
    %p49 = scmp.ne.s32.totalorder %s44, %s46
    %p50 = scmp.eq.s32.totalorder %s10, 0
    %p51 = por %p49, %p50
    %p52 = scmp.ne.s32.totalorder %s44, %s46
    %p53 = scmp.eq.s32.totalorder %s15, 1
    %p54 = por %p52, %p53
    %p55 = scmp.ne.s32.totalorder %s46, %s47
    %p56 = scmp.eq.s32.totalorder %s15, 0
    %p57 = por %p55, %p56
    %p58 = scmp.ne.s32.totalorder %s46, %s47
    %p59 = scmp.eq.s32.totalorder %s16, 1
    %p60 = por %p58, %p59
    %p62 = scmp.ne.s32.totalorder %s47, %s61
    %p63 = scmp.eq.s32.totalorder %s16, 0
    %p64 = por %p62, %p63
    %s66 = sadd.s32 %s65, 1
    %p69 = scmp.eq.s32.totalorder %s10, 1
    %p70 = scmp.ne.s32.totalorder %s65, %s67
    %p71 = scmp.eq.s32.totalorder %s10, 0
    %p72 = por %p70, %p71
    %p73 = scmp.ne.s32.totalorder %s65, %s67
    %p74 = scmp.eq.s32.totalorder %s15, 1
    %p75 = por %p73, %p74
    %p76 = scmp.ne.s32.totalorder %s67, %s68
    %p77 = scmp.eq.s32.totalorder %s15, 0
    %p78 = por %p76, %p77
    %p79 = scmp.ne.s32.totalorder %s67, %s68
    %p80 = scmp.eq.s32.totalorder %s16, 1
    %p81 = por %p79, %p80
    %p83 = scmp.ne.s32.totalorder %s68, %s82
    %p84 = scmp.eq.s32.totalorder %s16, 0
    %p85 = por %p83, %p84
    %s87 = sadd.s32 %s86, 1
    %p90 = scmp.eq.s32.totalorder %s10, 1
    %p91 = scmp.ne.s32.totalorder %s86, %s88
    %p92 = scmp.eq.s32.totalorder %s10, 0
    %p93 = por %p91, %p92
    %p94 = scmp.ne.s32.totalorder %s86, %s88
    %p95 = scmp.eq.s32.totalorder %s15, 1
    %p96 = por %p94, %p95
    %p97 = scmp.ne.s32.totalorder %s88, %s89
    %p98 = scmp.eq.s32.totalorder %s15, 0
    %p99 = por %p97, %p98
    %p100 = scmp.ne.s32.totalorder %s88, %s89
    %p101 = scmp.eq.s32.totalorder %s16, 1
    %p102 = por %p100, %p101
    %p104 = scmp.ne.s32.totalorder %s89, %s103
    %p105 = scmp.eq.s32.totalorder %s16, 0
    %p106 = por %p104, %p105
    %s107 = ssub.s32 %s10, %s17
    %p108 = scmp.eq.s32.totalorder %s107, 0
    %s110 = sadd.s32 %s109, 1
    %s111 = scalar_select %p108, %s109, %s110
    %p114 = pneg %p108
    %p115 = scmp.eq.s32.totalorder %s10, 1
    %p116 = por %p114, %p115
    %p117 = scmp.ne.s32.totalorder %s109, %s112
    %p118 = scmp.eq.s32.totalorder %s10, 0
    %p119 = por %p117, %p118
    %p120 = scmp.ne.s32.totalorder %s109, %s112
    %p121 = scmp.eq.s32.totalorder %s15, 1
    %p122 = por %p120, %p121
    %p123 = scmp.ne.s32.totalorder %s112, %s113
    %p124 = scmp.eq.s32.totalorder %s15, 0
    %p125 = por %p123, %p124
    %p126 = scmp.ne.s32.totalorder %s112, %s113
    %p127 = scmp.eq.s32.totalorder %s16, 1
    %p128 = por %p126, %p127
    %p130 = scmp.ne.s32.totalorder %s113, %s129
    %p131 = scmp.eq.s32.totalorder %s16, 0
    %p132 = por %p130, %p131
    %p133 = scmp.le.s32.totalorder 1, %s10
    %p134 = scmp.lt.s32.totalorder %s10, 3
    %p135 = pnand %p133, %p134
    %p136 = pneg %p135
    // Predicated region
    $region9: #{fm_embedding_forward.1} parent=5 // pred_check
      _
    $region10: #{fm_embedding_forward.1} parent=5 // pred_check_branch
      %138 = sbr.rel (%p135) target = $region12
    $region11: #{fm_embedding_forward.1} parent=5 // pred_region
      %s139 = ssub.s32 %s10, 1
      // Predicated region
      $region13: #{fm_embedding_forward.1} parent=11 // pred_check
        %p140 = pneg %p57
      $region14: #{fm_embedding_forward.1} parent=11 // pred_check_branch
        %142 = sbr.rel (%p140) target = $region16
      $region15: #{fm_embedding_forward.1} parent=11 // pred_region
        _
      $region16: #{fm_embedding_forward.1} parent=11 // pred_fallthru
        _
      // Predicated region
      $region17: #{fm_embedding_forward.1} parent=11 // pred_check
        %p143 = pneg %p78
      $region18: #{fm_embedding_forward.1} parent=11 // pred_check_branch
        %145 = sbr.rel (%p143) target = $region20
      $region19: #{fm_embedding_forward.1} parent=11 // pred_region
        _
      $region20: #{fm_embedding_forward.1} parent=11 // pred_fallthru
        _
      // Predicated region
      $region21: #{fm_embedding_forward.1} parent=11 // pred_check
        %p146 = pneg %p99
      $region22: #{fm_embedding_forward.1} parent=11 // pred_check_branch
        %148 = sbr.rel (%p146) target = $region24
      $region23: #{fm_embedding_forward.1} parent=11 // pred_region
        _
      $region24: #{fm_embedding_forward.1} parent=11 // pred_fallthru
        _
    $region12: #{fm_embedding_forward.1} parent=5 // pred_fallthru
      _
    %p149 = scmp.lt.s32.totalorder %s10, 2
    // Predicated region
    $region25: #{fm_embedding_forward.1} parent=5 // pred_check
      %p150 = pneg %p149
    $region26: #{fm_embedding_forward.1} parent=5 // pred_check_branch
      %152 = sbr.rel (%p150) target = $region28
    $region27: #{fm_embedding_forward.1} parent=5 // pred_region
      // Predicated region
      $region29: #{fm_embedding_forward.1} parent=27 // pred_check
        %p153 = pneg %p30
      $region30: #{fm_embedding_forward.1} parent=27 // pred_check_branch
        %155 = sbr.rel (%p153) target = $region32
      $region31: #{fm_embedding_forward.1} parent=27 // pred_region
        %p156 = scmp.lt.s32.totalorder %s10, 1
        %s157 = scalar_select %p156, %s10, 1
        %s158 = smul.addr %s157, 8
        %s159 = scalar_lea.vmem %s0, %s158
      $region32: #{fm_embedding_forward.1} parent=27 // pred_fallthru
        _
    $region28: #{fm_embedding_forward.1} parent=5 // pred_fallthru
      _
    %p160 = scmp.le.s32.totalorder 1, %s10
    %p161 = scmp.lt.s32.totalorder %s10, 3
    %p162 = pnand %p160, %p161
    %p163 = pneg %p162
    // Predicated region
    $region33: #{fm_embedding_forward.1} parent=5 // pred_check
      _
    $region34: #{fm_embedding_forward.1} parent=5 // pred_check_branch
      %165 = sbr.rel (%p162) target = $region36
    $region35: #{fm_embedding_forward.1} parent=5 // pred_region
      %s166 = ssub.s32 %s10, 1
      %p167 = scmp.lt.s32.totalorder %s15, 1
      %s168 = scalar_select %p167, %s15, 1
      %s169 = smul.addr %s168, 8
      %s170 = scalar_lea.vmem %s0, %s169
      %p171 = pneg %p36
      %p172 = pneg %p33
      %p173 = pneg %p57
      %p174 = pneg %p54
      %p175 = pneg %p78
      %p176 = pneg %p75
      %p177 = pneg %p99
      %p178 = pneg %p96
      %p179 = pneg %p125
      %p180 = pneg %p122
      %p181 = scmp.lt.s32.totalorder %s15, 1
      %s182 = scalar_select %p181, %s15, 1
      %s183 = smul.addr %s182, 8
      %s184 = scalar_lea.vmem %s4, %s183
      %p185 = scmp.lt.s32.totalorder %s15, 1
      %s186 = scalar_select %p185, %s15, 1
      %s187 = smul.addr %s186, 8
      %s188 = scalar_lea.vmem %s0, %s187
      %p189 = scmp.lt.s32.totalorder %s15, 1
      %s190 = scalar_select %p189, %s15, 1
      %s191 = smul.addr %s190, 8
      %s192 = scalar_lea.vmem %s4, %s191
      %v193 = vld [vmem:[%s188] sm:$0xff]
      %v194 = vlaneseq
      %v195 = vand.u32 %v194, 127
      %196 = vset.pattern.permute.xlu0 0
      %197 = vperm.xlu0 %196, %v193
      %v198 = vpop.permute.xlu0 %197
      %vm199 = vcmp.eq.s32.totalorder %v195, %v198
      %200 = vset.pattern.permute.xlu0 1
      %201 = vperm.xlu0 %200, %v193
      %v202 = vpop.permute.xlu0 %201
      %vm203 = vcmp.eq.s32.totalorder %v195, %v202
      %vm204 = vmor %vm199, %vm203
      %205 = vset.pattern.permute.xlu0 2
      %206 = vperm.xlu0 %205, %v193
      %v207 = vpop.permute.xlu0 %206
      %vm208 = vcmp.eq.s32.totalorder %v195, %v207
      %vm209 = vmor %vm204, %vm208
      %210 = vset.pattern.permute.xlu0 3
      %211 = vperm.xlu0 %210, %v193
      %v212 = vpop.permute.xlu0 %211
      %vm213 = vcmp.eq.s32.totalorder %v195, %v212
      %vm214 = vmor %vm209, %vm213
      %v215 = vsel %vm214, 1.0, 0.0
      %v216 = vpack.c.bf16 %v215, %v215
      %v217 = vld [vmem:[%s1] sm:$0xf]
      %v218 = vld [vmem:[%s1 + $0x4] sm:$0xf]
      %v219 = vld [vmem:[%s1 + $0x8] sm:$0xf]
      %v220 = vld [vmem:[%s1 + $0xc] sm:$0xf]
      %v221 = vld [vmem:[%s1 + $0x10] sm:$0xf]
      %v222 = vld [vmem:[%s1 + $0x14] sm:$0xf]
      %v223 = vld [vmem:[%s1 + $0x18] sm:$0xf]
      %v224 = vld [vmem:[%s1 + $0x1c] sm:$0xf]
      %v225 = vld [vmem:[%s1 + $0x20] sm:$0xf]
      %v226 = vld [vmem:[%s1 + $0x24] sm:$0xf]
      %v227 = vld [vmem:[%s1 + $0x28] sm:$0xf]
      %v228 = vld [vmem:[%s1 + $0x2c] sm:$0xf]
      %v229 = vld [vmem:[%s1 + $0x30] sm:$0xf]
      %v230 = vld [vmem:[%s1 + $0x34] sm:$0xf]
      %v231 = vld [vmem:[%s1 + $0x38] sm:$0xf]
      %v232 = vld [vmem:[%s1 + $0x3c] sm:$0xf]
      %v233 = vld [vmem:[%s2] sm:$0xf]
      %v234 = vld [vmem:[%s2 + $0x4] sm:$0xf]
      %v235 = vld [vmem:[%s2 + $0x8] sm:$0xf]
      %v236 = vld [vmem:[%s2 + $0xc] sm:$0xf]
      %v237 = vld [vmem:[%s2 + $0x10] sm:$0xf]
      %v238 = vld [vmem:[%s2 + $0x14] sm:$0xf]
      %v239 = vld [vmem:[%s2 + $0x18] sm:$0xf]
      %v240 = vld [vmem:[%s2 + $0x1c] sm:$0xf]
      %v241 = vld [vmem:[%s2 + $0x20] sm:$0xf]
      %v242 = vld [vmem:[%s2 + $0x24] sm:$0xf]
      %v243 = vld [vmem:[%s2 + $0x28] sm:$0xf]
      %v244 = vld [vmem:[%s2 + $0x2c] sm:$0xf]
      %v245 = vld [vmem:[%s2 + $0x30] sm:$0xf]
      %v246 = vld [vmem:[%s2 + $0x34] sm:$0xf]
      %v247 = vld [vmem:[%s2 + $0x38] sm:$0xf]
      %v248 = vld [vmem:[%s2 + $0x3c] sm:$0xf]
      %v265 = vunpack.c.l.b16 %v233
      %v266 = vunpack.c.l.b16 %v234
      %v267 = vunpack.c.l.b16 %v235
      %v268 = vunpack.c.l.b16 %v236
      %v269 = vunpack.c.l.b16 %v237
      %v270 = vunpack.c.l.b16 %v238
      %v271 = vunpack.c.l.b16 %v239
      %v272 = vunpack.c.l.b16 %v240
      %v273 = vunpack.c.l.b16 %v241
      %v274 = vunpack.c.l.b16 %v242
      %v275 = vunpack.c.l.b16 %v243
      %v276 = vunpack.c.l.b16 %v244
      %v277 = vunpack.c.l.b16 %v245
      %v278 = vunpack.c.l.b16 %v246
      %v279 = vunpack.c.l.b16 %v247
      %v280 = vunpack.c.l.b16 %v248
      %v281 = vpack.c.b16 %v266, %v265
      %v282 = vpack.c.b16 %v268, %v267
      %v283 = vpack.c.b16 %v270, %v269
      %v284 = vpack.c.b16 %v272, %v271
      %v285 = vpack.c.b16 %v274, %v273
      %v286 = vpack.c.b16 %v276, %v275
      %v287 = vpack.c.b16 %v278, %v277
      %v288 = vpack.c.b16 %v280, %v279
      %297 = vmatpush.bf16.msra.mxu0 %v288
      %298 = vmatpush.bf16.msra.mxu0 %v287
      %299 = vmatpush.bf16.msra.mxu0 %v286
      %300 = vmatpush.bf16.msra.mxu0 %v285
      %301 = vmatpush.bf16.msra.mxu0 %v284
      %302 = vmatpush.bf16.msra.mxu0 %v283
      %303 = vmatpush.bf16.msra.mxu0 %v282
      %304 = vmatpush.bf16.msra.mxu0 %v281
      %305 = vmatmul.bf16.gmra.mxu0 %v216
      %v306 = vpop.f32.mrf.mxu0
      %v307 = vadd.f32 0.0, %v306
      %v308 = vpop.f32.mrf.mxu0
      %309 = vdwg.mxu0
      %v326 = vunpack.c.l.b16 %v217
      %v327 = vunpack.c.l.b16 %v218
      %v328 = vunpack.c.l.b16 %v219
      %v329 = vunpack.c.l.b16 %v220
      %v330 = vunpack.c.l.b16 %v221
      %v331 = vunpack.c.l.b16 %v222
      %v332 = vunpack.c.l.b16 %v223
      %v333 = vunpack.c.l.b16 %v224
      %v334 = vunpack.c.l.b16 %v225
      %v335 = vunpack.c.l.b16 %v226
      %v336 = vunpack.c.l.b16 %v227
      %v337 = vunpack.c.l.b16 %v228
      %v338 = vunpack.c.l.b16 %v229
      %v339 = vunpack.c.l.b16 %v230
      %v340 = vunpack.c.l.b16 %v231
      %v341 = vunpack.c.l.b16 %v232
      %v342 = vpack.c.b16 %v327, %v326
      %v343 = vpack.c.b16 %v329, %v328
      %v344 = vpack.c.b16 %v331, %v330
      %v345 = vpack.c.b16 %v333, %v332
      %v346 = vpack.c.b16 %v335, %v334
      %v347 = vpack.c.b16 %v337, %v336
      %v348 = vpack.c.b16 %v339, %v338
      %v349 = vpack.c.b16 %v341, %v340
      %358 = vmatpush.bf16.msra.mxu0 %v349
      %359 = vmatpush.bf16.msra.mxu0 %v348
      %360 = vmatpush.bf16.msra.mxu0 %v347
      %361 = vmatpush.bf16.msra.mxu0 %v346
      %362 = vmatpush.bf16.msra.mxu0 %v345
      %363 = vmatpush.bf16.msra.mxu0 %v344
      %364 = vmatpush.bf16.msra.mxu0 %v343
      %365 = vmatpush.bf16.msra.mxu0 %v342
      %366 = vmatmul.bf16.gmra.mxu0 %v216
      %v367 = vpop.f32.mrf.mxu0
      %v368 = vadd.f32 %v307, %v367
      %v369 = vpop.f32.mrf.mxu0
      %370 = vdwg.mxu0
      %v371 = vld [vmem:[%s3] sm:$0xf]
      %v372 = vld [vmem:[%s3 + $0x4] sm:$0xf]
      %v373 = vld [vmem:[%s3 + $0x8] sm:$0xf]
      %v374 = vld [vmem:[%s3 + $0xc] sm:$0xf]
      %v375 = vld [vmem:[%s3 + $0x10] sm:$0xf]
      %v376 = vld [vmem:[%s3 + $0x14] sm:$0xf]
      %v377 = vld [vmem:[%s3 + $0x18] sm:$0xf]
      %v378 = vld [vmem:[%s3 + $0x1c] sm:$0xf]
      %v379 = vld [vmem:[%s3 + $0x20] sm:$0xf]
      %v380 = vld [vmem:[%s3 + $0x24] sm:$0xf]
      %v381 = vld [vmem:[%s3 + $0x28] sm:$0xf]
      %v382 = vld [vmem:[%s3 + $0x2c] sm:$0xf]
      %v383 = vld [vmem:[%s3 + $0x30] sm:$0xf]
      %v384 = vld [vmem:[%s3 + $0x34] sm:$0xf]
      %v385 = vld [vmem:[%s3 + $0x38] sm:$0xf]
      %v386 = vld [vmem:[%s3 + $0x3c] sm:$0xf]
      %v403 = vunpack.c.l.b16 %v371
      %v404 = vunpack.c.l.b16 %v372
      %v405 = vunpack.c.l.b16 %v373
      %v406 = vunpack.c.l.b16 %v374
      %v407 = vunpack.c.l.b16 %v375
      %v408 = vunpack.c.l.b16 %v376
      %v409 = vunpack.c.l.b16 %v377
      %v410 = vunpack.c.l.b16 %v378
      %v411 = vunpack.c.l.b16 %v379
      %v412 = vunpack.c.l.b16 %v380
      %v413 = vunpack.c.l.b16 %v381
      %v414 = vunpack.c.l.b16 %v382
      %v415 = vunpack.c.l.b16 %v383
      %v416 = vunpack.c.l.b16 %v384
      %v417 = vunpack.c.l.b16 %v385
      %v418 = vunpack.c.l.b16 %v386
      %v419 = vpack.c.b16 %v404, %v403
      %v420 = vpack.c.b16 %v406, %v405
      %v421 = vpack.c.b16 %v408, %v407
      %v422 = vpack.c.b16 %v410, %v409
      %v423 = vpack.c.b16 %v412, %v411
      %v424 = vpack.c.b16 %v414, %v413
      %v425 = vpack.c.b16 %v416, %v415
      %v426 = vpack.c.b16 %v418, %v417
      %435 = vmatpush.bf16.msra.mxu0 %v426
      %436 = vmatpush.bf16.msra.mxu0 %v425
      %437 = vmatpush.bf16.msra.mxu0 %v424
      %438 = vmatpush.bf16.msra.mxu0 %v423
      %439 = vmatpush.bf16.msra.mxu0 %v422
      %440 = vmatpush.bf16.msra.mxu0 %v421
      %441 = vmatpush.bf16.msra.mxu0 %v420
      %442 = vmatpush.bf16.msra.mxu0 %v419
      %443 = vmatmul.bf16.gmra.mxu0 %v216
      %v444 = vpop.f32.mrf.mxu0
      %v445 = vadd.f32 0.0, %v444
      %v446 = vpop.f32.mrf.mxu0
      %447 = vdwg.mxu0
      %v448 = vadd.f32 %v368, %v445
      %449 = vst [vmem:[%s192] sm:$0xff] %v448
      %p450 = scmp.lt.s32.totalorder %s15, 1
      %s451 = scalar_select %p450, %s15, 1
      %s452 = smul.addr %s451, 8
      %s453 = scalar_lea.vmem %s4, %s452
      // Predicated region
      $region37: #{fm_embedding_forward.1} parent=35 // pred_check
        %p454 = pneg %p122
      $region38: #{fm_embedding_forward.1} parent=35 // pred_check_branch
        %456 = sbr.rel (%p454) target = $region40
      $region39: #{fm_embedding_forward.1} parent=35 // pred_region
        _
      $region40: #{fm_embedding_forward.1} parent=35 // pred_fallthru
        _
    $region36: #{fm_embedding_forward.1} parent=5 // pred_fallthru
      _
    %p457 = scmp.le.s32.totalorder 2, %s10
    // Predicated region
    $region41: #{fm_embedding_forward.1} parent=5 // pred_check
      %p458 = pneg %p457
    $region42: #{fm_embedding_forward.1} parent=5 // pred_check_branch
      %460 = sbr.rel (%p458) target = $region44
    $region43: #{fm_embedding_forward.1} parent=5 // pred_region
      %s461 = ssub.s32 %s10, 2
      // Predicated region
      $region45: #{fm_embedding_forward.1} parent=43 // pred_check
        %p462 = pneg %p128
      $region46: #{fm_embedding_forward.1} parent=43 // pred_check_branch
        %464 = sbr.rel (%p462) target = $region48
      $region47: #{fm_embedding_forward.1} parent=43 // pred_region
        %p465 = scmp.lt.s32.totalorder %s16, 1
        %s466 = scalar_select %p465, %s16, 1
        %s467 = smul.addr %s466, 8
        %s468 = scalar_lea.vmem %s4, %s467
      $region48: #{fm_embedding_forward.1} parent=43 // pred_fallthru
        _
    $region44: #{fm_embedding_forward.1} parent=5 // pred_fallthru
      _
  $region6: #{fm_embedding_forward.1} parent=0 // loop_footer
    %s14 = sadd.s32 1, %s10
  $region7: #{fm_embedding_forward.1} parent=0 // loop_footer_branch
    %9 = sbr.rel target = $region3
  $region8: #{fm_embedding_forward.1} parent=0 // loop_exit
    _

</llo_original>
